<compile_context>
chip_gen: v6e
topology: v6e:2x2x1
jax: 0.10.0
libtpu: 0.0.40
codegen_flags: <defaults>
</compile_context>

<pallas_src>
import functools

import jax
import jax.numpy as jnp
import numpy as np
from jax.experimental import pallas as pl
from jax.experimental.pallas import tpu as pltpu


def _round_up(x, m):
    return (x + m - 1) // m * m


# ---------------------------------------------------------------------------
# Fused kernel: batched eos-row DMA gather -> bf16 encode -> contrastive CE
# ---------------------------------------------------------------------------
def _fused_kernel(seq_len_ref, xq_hbm, xt_hbm, xn_hbm, w_ref, b_ref,
                  out_ref, gather_ref, dma_sem, *,
                  bq, bt, bn, bq_pad, bt_pad, normalize, temperature):
    neg_ratio = bn // bq
    stride = bq // bt
    inv_t = 1.0 / temperature
    neg_base = bq_pad + bt_pad

    # ------------------------------------------------------------------
    # Phase 1: issue ALL eos-row gathers (HBM -> VMEM scratch), kept in
    # flight.  One DMA semaphore per group so each group can be drained
    # (and encoded) while later groups' copies are still flying.
    # ------------------------------------------------------------------
    @pl.loop(0, bq)
    def _(r):
        pltpu.make_async_copy(xq_hbm.at[r, seq_len_ref[r]],
                              gather_ref.at[r], dma_sem.at[0]).start()

    @pl.loop(0, bt)
    def _(r):
        pltpu.make_async_copy(xt_hbm.at[r, seq_len_ref[bq + r]],
                              gather_ref.at[bq_pad + r], dma_sem.at[1]).start()

    # Negative rows are scattered so ratio-block r occupies rows
    # [neg_base + r*bq_pad, neg_base + r*bq_pad + bq): every later slice is
    # 8-sublane aligned and the (bq, R) scores come from plain elementwise
    # multiplies (no reshape, no full (bq, bn) matmul).
    for r in range(neg_ratio):
        @pl.loop(0, bq)
        def _(b, r=r):
            j = b * neg_ratio + r
            pltpu.make_async_copy(xn_hbm.at[j, seq_len_ref[bq + bt + j]],
                                  gather_ref.at[neg_base + r * bq_pad + b],
                                  dma_sem.at[2]).start()

    # ------------------------------------------------------------------
    # Phase 2: per-group wait + bf16 dense encode (+ optional L2 norm).
    # Group k's MXU work overlaps group k+1's row DMAs.
    # ------------------------------------------------------------------
    w_mat = w_ref[...]          # (H, H) bf16, single-buffered VMEM resident
    bias = b_ref[...]           # (1, H) f32

    def encode_group(src_hbm, n_copies, rows, row_off, sem_idx):
        @pl.loop(0, n_copies)
        def _(r):
            # Shape-only descriptor: each wait drains one row-sized signal.
            pltpu.make_async_copy(src_hbm.at[0, 0], gather_ref.at[row_off],
                                  dma_sem.at[sem_idx]).wait()
        x = gather_ref[pl.ds(row_off, rows), :]             # aligned start
        h = jnp.tanh(jnp.dot(x.astype(jnp.bfloat16), w_mat,
                             preferred_element_type=jnp.float32) + bias)
        if normalize:
            ssq = jnp.sum(h * h, axis=-1, keepdims=True)
            # x * rsqrt(max(|x|^2, eps^2)) == x / max(|x|, eps), eps = 1e-12
            h = h * jax.lax.rsqrt(jnp.maximum(ssq, 1e-24))
        return h                                            # (rows, H) f32

    h_q = encode_group(xq_hbm, bq, bq_pad, 0, 0)
    h_t = encode_group(xt_hbm, bt, bt_pad, bq_pad, 1)
    h_n = encode_group(xn_hbm, bn, neg_ratio * bq_pad, neg_base, 2)

    q = h_q[:bq]                                            # (bq, H)
    t = h_t[:bt]                                            # (bt, H)

    # ------------------------------------------------------------------
    # Phase 3: similarity + temperature-scaled cross entropy (f32).
    # ------------------------------------------------------------------
    contract = (((1,), (1,)), ((), ()))                     # A @ B^T on MXU
    pos = jax.lax.dot_general(q, t, contract,
                              preferred_element_type=jnp.float32) * inv_t

    neg_cols = []                                           # R columns (bq,1)
    for r in range(neg_ratio):
        n_r = h_n[r * bq_pad:r * bq_pad + bq]               # aligned slice
        neg_cols.append(jnp.sum(q * n_r, axis=-1, keepdims=True) * inv_t)

    # picked logit: scores[b, b*stride] (always inside the pos block)
    row_p = jax.lax.broadcasted_iota(jnp.int32, (bq, bt), 0)
    col_p = jax.lax.broadcasted_iota(jnp.int32, (bq, bt), 1)
    picked = jnp.sum(jnp.where(col_p == row_p * stride, pos, 0.0),
                     axis=1, keepdims=True)                 # (bq, 1)

    # stable logsumexp over [pos row | R negative scores]
    m = jnp.max(pos, axis=1, keepdims=True)
    for c in neg_cols:
        m = jnp.maximum(m, c)
    se = jnp.sum(jnp.exp(pos - m), axis=1, keepdims=True)
    for c in neg_cols:
        se = se + jnp.exp(c - m)
    lse = m + jnp.log(se)                                   # (bq, 1)

    out_ref[0, 0] = jnp.mean(lse - picked)


# ---------------------------------------------------------------------------
# MMEBModel.forward equivalent (single device, qry+tgt+neg provided)
# ---------------------------------------------------------------------------
def mmeb_forward(qry, tgt, neg, params, *, normalize=True, temperature=0.05):
    w, b = params
    xq, mq = qry["inputs_embeds"], qry["attention_mask"]
    xt, mt = tgt["inputs_embeds"], tgt["attention_mask"]
    xn, mn = neg["inputs_embeds"], neg["attention_mask"]
    bq, _, hdim = xq.shape
    bt = xt.shape[0]
    bn = xn.shape[0]
    assert bn % bq == 0 and bq % bt == 0, "neg_ratio / target stride need divisibility"
    neg_ratio = bn // bq

    bq_pad = _round_up(bq, 8)
    bt_pad = _round_up(bt, 8)
    gather_rows = bq_pad + bt_pad + neg_ratio * bq_pad

    # pooling == 'last'/'eos': token index = attention_mask.sum(1) - 1,
    # clamped at 0 so an all-padding row cannot drive an OOB DMA.
    seq_len = jnp.maximum(
        jnp.concatenate([jnp.sum(mq, axis=1), jnp.sum(mt, axis=1),
                         jnp.sum(mn, axis=1)]).astype(jnp.int32) - 1, 0)

    vmem_need = (w.size * w.dtype.itemsize + b.size * b.dtype.itemsize
                 + gather_rows * hdim * 4)
    vmem_limit = int(min(64 * 2**20, max(2 * vmem_need + (1 << 20), 8 * 2**20)))

    kernel = functools.partial(
        _fused_kernel, bq=bq, bt=bt, bn=bn, bq_pad=bq_pad, bt_pad=bt_pad,
        normalize=normalize, temperature=temperature)

    loss = pl.pallas_call(
        kernel,
        out_shape=jax.ShapeDtypeStruct((1, 1), jnp.float32),
        in_specs=[
            pl.BlockSpec(memory_space=pltpu.MemorySpace.SMEM),   # seq_len
            pl.BlockSpec(memory_space=pl.ANY),                   # xq (HBM)
            pl.BlockSpec(memory_space=pl.ANY),                   # xt (HBM)
            pl.BlockSpec(memory_space=pl.ANY),                   # xn (HBM)
            pl.BlockSpec(memory_space=pltpu.MemorySpace.VMEM),   # W  (bf16)
            pl.BlockSpec(memory_space=pltpu.MemorySpace.VMEM),   # b  (f32)
        ],
        out_specs=pl.BlockSpec(memory_space=pltpu.MemorySpace.SMEM),
        scratch_shapes=[
            pltpu.VMEM((gather_rows, hdim), jnp.float32),  # gathered eos rows
            pltpu.SemaphoreType.DMA((3,)),                 # one sem per group
        ],
        compiler_params=pltpu.CompilerParams(vmem_limit_bytes=vmem_limit),
    )(seq_len, xq, xt, xn, w, b)
    return loss[0, 0]


# ---------------------------------------------------------------------------
# Pure-JAX reference for verification (same mixed precision as the kernel)
# ---------------------------------------------------------------------------
def ref_forward(qry, tgt, neg, params, *, normalize=True, temperature=0.05):
    w, b = params

    def enc(x, mask):
        sl = jnp.maximum(jnp.sum(mask, axis=1) - 1, 0)
        rows = x[jnp.arange(x.shape[0]), sl]                    # eos gather
        h = jnp.tanh(jnp.dot(rows.astype(jnp.bfloat16), w,
                             preferred_element_type=jnp.float32) + b[0])
        if normalize:
            h = h * jax.lax.rsqrt(
                jnp.maximum(jnp.sum(h * h, axis=-1, keepdims=True), 1e-24))
        return h

    q = enc(qry["inputs_embeds"], qry["attention_mask"])
    t = enc(tgt["inputs_embeds"], tgt["attention_mask"])
    n = enc(neg["inputs_embeds"], neg["attention_mask"])
    B, H = q.shape
    R = n.shape[0] // B
    pos = q @ t.T
    negs = jnp.sum(q[:, None, :] * n.reshape(B, R, H), axis=-1)
    scores = jnp.concatenate([pos, negs], axis=1) / temperature
    target = jnp.arange(B) * (B // t.shape[0])
    lse = jax.scipy.special.logsumexp(scores, axis=1)
    return jnp.mean(lse - scores[jnp.arange(B), target])


if __name__ == "__main__":
    B, S, H, R = 2, 8, 128, 2  # batch, seq, hidden (lane-dense), neg_ratio

    key = jax.random.PRNGKey(0)
    kq, kt, kn, kw = jax.random.split(key, 4)

    # deterministic synthetic encoder parameters (W in bf16 for the MXU)
    w = (0.1 * jax.random.normal(kw, (H, H), jnp.float32)).astype(jnp.bfloat16)
    b = 0.01 * jnp.arange(H, dtype=jnp.float32).reshape(1, H)

    def make_mask(lengths):
        return jnp.asarray(
            (np.arange(S)[None, :] < np.asarray(lengths)[:, None]).astype(np.int32))

    qry = {"inputs_embeds": jax.random.normal(kq, (B, S, H), jnp.float32),
           "attention_mask": make_mask([8, 5])}
    tgt = {"inputs_embeds": jax.random.normal(kt, (B, S, H), jnp.float32),
           "attention_mask": make_mask([6, 8])}
    neg = {"inputs_embeds": jax.random.normal(kn, (B * R, S, H), jnp.float32),
           "attention_mask": make_mask([8, 4, 7, 3])}

    loss = mmeb_forward(qry, tgt, neg, (w, b), normalize=True, temperature=0.05)
    loss = jax.block_until_ready(loss)

    ref = ref_forward(qry, tgt, neg, (w, b), normalize=True, temperature=0.05)
    assert np.allclose(np.asarray(loss), np.asarray(ref), rtol=1e-3, atol=1e-3), (
        float(loss), float(ref))
    print("KERNEL_OK")
</pallas_src>

<mosaic_0001>
module attributes {stable_mosaic.version = 11 : i64} {
  func.func @_fused_kernel(%arg0: memref<8xi32, #tpu.memory_space<smem>>, %arg1: memref<2x8x128xf32, #tpu.memory_space<any>>, %arg2: memref<2x8x128xf32, #tpu.memory_space<any>>, %arg3: memref<4x8x128xf32, #tpu.memory_space<any>>, %arg4: memref<128x128xbf16, #tpu.memory_space<vmem>>, %arg5: memref<1x128xf32, #tpu.memory_space<vmem>>, %arg6: memref<1x1xf32, #tpu.memory_space<smem>>, %arg7: memref<32x128xf32, #tpu.memory_space<vmem>>, %arg8: memref<3x!tpu.dma_semaphore, #tpu.memory_space<semaphore_mem>>) attributes {dimension_semantics = [], scalar_prefetch = 0 : i64, scratch_operands = 2 : i64, tpu.core_type = #tpu.core_type<tc>} {
    %c0_i32 = arith.constant 0 : i32
    %c2_i32 = arith.constant 2 : i32
    %0 = arith.addi %c0_i32, %c2_i32 : i32
    %c1_i32 = arith.constant 1 : i32
    scf.for %arg9 = %c0_i32 to %0 step %c1_i32  : i32 {
      %c1_i32_51 = arith.constant 1 : i32
      %101 = arith.muli %arg9, %c1_i32_51 : i32
      %c0_i32_52 = arith.constant 0 : i32
      %102 = arith.addi %c0_i32_52, %101 : i32
      %103 = arith.index_cast %102 : i32 to index
      %104 = memref.load %arg0[%103] : memref<8xi32, #tpu.memory_space<smem>>
      %c0_i32_53 = arith.constant 0 : i32
      %c0_i32_54 = arith.constant 0 : i32
      %105 = tpu.memref_slice %arg1[%102, %104, %c0_i32_54] : memref<2x8x128xf32, #tpu.memory_space<any>> -> memref<1x1x128xf32, #tpu.memory_space<any>>
      %106 = tpu.memref_squeeze %105 : memref<1x1x128xf32, #tpu.memory_space<any>> -> memref<128xf32, #tpu.memory_space<any>>
      %c0_i32_55 = arith.constant 0 : i32
      %107 = tpu.memref_slice %arg7[%102, %c0_i32_55] : memref<32x128xf32, #tpu.memory_space<vmem>> -> memref<1x128xf32, #tpu.memory_space<vmem>>
      %108 = tpu.memref_squeeze %107 : memref<1x128xf32, #tpu.memory_space<vmem>> -> memref<128xf32, #tpu.memory_space<vmem>>
      %109 = tpu.memref_slice %arg8[%c0_i32_53] : memref<3x!tpu.dma_semaphore, #tpu.memory_space<semaphore_mem>> -> memref<1x!tpu.dma_semaphore, #tpu.memory_space<semaphore_mem>>
      %110 = tpu.memref_squeeze %109 : memref<1x!tpu.dma_semaphore, #tpu.memory_space<semaphore_mem>> -> memref<!tpu.dma_semaphore, #tpu.memory_space<semaphore_mem>>
      tpu.enqueue_dma source(%106 : memref<128xf32, #tpu.memory_space<any>>) target(%108 : memref<128xf32, #tpu.memory_space<vmem>>) target_semaphore(%110 : memref<!tpu.dma_semaphore, #tpu.memory_space<semaphore_mem>>)
    }
    %c2_i32_0 = arith.constant 2 : i32
    %c0_i32_1 = arith.constant 0 : i32
    %c2_i32_2 = arith.constant 2 : i32
    %1 = arith.addi %c0_i32_1, %c2_i32_2 : i32
    %c1_i32_3 = arith.constant 1 : i32
    scf.for %arg9 = %c0_i32_1 to %1 step %c1_i32_3  : i32 {
      %c1_i32_51 = arith.constant 1 : i32
      %101 = arith.muli %arg9, %c1_i32_51 : i32
      %c0_i32_52 = arith.constant 0 : i32
      %102 = arith.addi %c0_i32_52, %101 : i32
      %c2_i32_53 = arith.constant 2 : i32
      %103 = arith.addi %c2_i32_53, %102 : i32
      %104 = arith.index_cast %103 : i32 to index
      %105 = memref.load %arg0[%104] : memref<8xi32, #tpu.memory_space<smem>>
      %c8_i32 = arith.constant 8 : i32
      %106 = arith.addi %c8_i32, %102 : i32
      %c1_i32_54 = arith.constant 1 : i32
      %c0_i32_55 = arith.constant 0 : i32
      %107 = tpu.memref_slice %arg2[%102, %105, %c0_i32_55] : memref<2x8x128xf32, #tpu.memory_space<any>> -> memref<1x1x128xf32, #tpu.memory_space<any>>
      %108 = tpu.memref_squeeze %107 : memref<1x1x128xf32, #tpu.memory_space<any>> -> memref<128xf32, #tpu.memory_space<any>>
      %c0_i32_56 = arith.constant 0 : i32
      %109 = tpu.memref_slice %arg7[%106, %c0_i32_56] : memref<32x128xf32, #tpu.memory_space<vmem>> -> memref<1x128xf32, #tpu.memory_space<vmem>>
      %110 = tpu.memref_squeeze %109 : memref<1x128xf32, #tpu.memory_space<vmem>> -> memref<128xf32, #tpu.memory_space<vmem>>
      %111 = tpu.memref_slice %arg8[%c1_i32_54] : memref<3x!tpu.dma_semaphore, #tpu.memory_space<semaphore_mem>> -> memref<1x!tpu.dma_semaphore, #tpu.memory_space<semaphore_mem>>
      %112 = tpu.memref_squeeze %111 : memref<1x!tpu.dma_semaphore, #tpu.memory_space<semaphore_mem>> -> memref<!tpu.dma_semaphore, #tpu.memory_space<semaphore_mem>>
      tpu.enqueue_dma source(%108 : memref<128xf32, #tpu.memory_space<any>>) target(%110 : memref<128xf32, #tpu.memory_space<vmem>>) target_semaphore(%112 : memref<!tpu.dma_semaphore, #tpu.memory_space<semaphore_mem>>)
    }
    %c2_i32_4 = arith.constant 2 : i32
    %c0_i32_5 = arith.constant 0 : i32
    %c2_i32_6 = arith.constant 2 : i32
    %2 = arith.addi %c0_i32_5, %c2_i32_6 : i32
    %c1_i32_7 = arith.constant 1 : i32
    scf.for %arg9 = %c0_i32_5 to %2 step %c1_i32_7  : i32 {
      %c1_i32_51 = arith.constant 1 : i32
      %101 = arith.muli %arg9, %c1_i32_51 : i32
      %c0_i32_52 = arith.constant 0 : i32
      %102 = arith.addi %c0_i32_52, %101 : i32
      %c2_i32_53 = arith.constant 2 : i32
      %103 = arith.muli %102, %c2_i32_53 : i32
      %c0_i32_54 = arith.constant 0 : i32
      %104 = arith.addi %103, %c0_i32_54 : i32
      %c4_i32_55 = arith.constant 4 : i32
      %105 = arith.addi %c4_i32_55, %104 : i32
      %106 = arith.index_cast %105 : i32 to index
      %107 = memref.load %arg0[%106] : memref<8xi32, #tpu.memory_space<smem>>
      %c16_i32 = arith.constant 16 : i32
      %108 = arith.addi %c16_i32, %102 : i32
      %c2_i32_56 = arith.constant 2 : i32
      %c0_i32_57 = arith.constant 0 : i32
      %109 = tpu.memref_slice %arg3[%104, %107, %c0_i32_57] : memref<4x8x128xf32, #tpu.memory_space<any>> -> memref<1x1x128xf32, #tpu.memory_space<any>>
      %110 = tpu.memref_squeeze %109 : memref<1x1x128xf32, #tpu.memory_space<any>> -> memref<128xf32, #tpu.memory_space<any>>
      %c0_i32_58 = arith.constant 0 : i32
      %111 = tpu.memref_slice %arg7[%108, %c0_i32_58] : memref<32x128xf32, #tpu.memory_space<vmem>> -> memref<1x128xf32, #tpu.memory_space<vmem>>
      %112 = tpu.memref_squeeze %111 : memref<1x128xf32, #tpu.memory_space<vmem>> -> memref<128xf32, #tpu.memory_space<vmem>>
      %113 = tpu.memref_slice %arg8[%c2_i32_56] : memref<3x!tpu.dma_semaphore, #tpu.memory_space<semaphore_mem>> -> memref<1x!tpu.dma_semaphore, #tpu.memory_space<semaphore_mem>>
      %114 = tpu.memref_squeeze %113 : memref<1x!tpu.dma_semaphore, #tpu.memory_space<semaphore_mem>> -> memref<!tpu.dma_semaphore, #tpu.memory_space<semaphore_mem>>
      tpu.enqueue_dma source(%110 : memref<128xf32, #tpu.memory_space<any>>) target(%112 : memref<128xf32, #tpu.memory_space<vmem>>) target_semaphore(%114 : memref<!tpu.dma_semaphore, #tpu.memory_space<semaphore_mem>>)
    }
    %c2_i32_8 = arith.constant 2 : i32
    %c0_i32_9 = arith.constant 0 : i32
    %c2_i32_10 = arith.constant 2 : i32
    %3 = arith.addi %c0_i32_9, %c2_i32_10 : i32
    %c1_i32_11 = arith.constant 1 : i32
    scf.for %arg9 = %c0_i32_9 to %3 step %c1_i32_11  : i32 {
      %c1_i32_51 = arith.constant 1 : i32
      %101 = arith.muli %arg9, %c1_i32_51 : i32
      %c0_i32_52 = arith.constant 0 : i32
      %102 = arith.addi %c0_i32_52, %101 : i32
      %c2_i32_53 = arith.constant 2 : i32
      %103 = arith.muli %102, %c2_i32_53 : i32
      %c1_i32_54 = arith.constant 1 : i32
      %104 = arith.addi %103, %c1_i32_54 : i32
      %c4_i32_55 = arith.constant 4 : i32
      %105 = arith.addi %c4_i32_55, %104 : i32
      %106 = arith.index_cast %105 : i32 to index
      %107 = memref.load %arg0[%106] : memref<8xi32, #tpu.memory_space<smem>>
      %c24_i32 = arith.constant 24 : i32
      %108 = arith.addi %c24_i32, %102 : i32
      %c2_i32_56 = arith.constant 2 : i32
      %c0_i32_57 = arith.constant 0 : i32
      %109 = tpu.memref_slice %arg3[%104, %107, %c0_i32_57] : memref<4x8x128xf32, #tpu.memory_space<any>> -> memref<1x1x128xf32, #tpu.memory_space<any>>
      %110 = tpu.memref_squeeze %109 : memref<1x1x128xf32, #tpu.memory_space<any>> -> memref<128xf32, #tpu.memory_space<any>>
      %c0_i32_58 = arith.constant 0 : i32
      %111 = tpu.memref_slice %arg7[%108, %c0_i32_58] : memref<32x128xf32, #tpu.memory_space<vmem>> -> memref<1x128xf32, #tpu.memory_space<vmem>>
      %112 = tpu.memref_squeeze %111 : memref<1x128xf32, #tpu.memory_space<vmem>> -> memref<128xf32, #tpu.memory_space<vmem>>
      %113 = tpu.memref_slice %arg8[%c2_i32_56] : memref<3x!tpu.dma_semaphore, #tpu.memory_space<semaphore_mem>> -> memref<1x!tpu.dma_semaphore, #tpu.memory_space<semaphore_mem>>
      %114 = tpu.memref_squeeze %113 : memref<1x!tpu.dma_semaphore, #tpu.memory_space<semaphore_mem>> -> memref<!tpu.dma_semaphore, #tpu.memory_space<semaphore_mem>>
      tpu.enqueue_dma source(%110 : memref<128xf32, #tpu.memory_space<any>>) target(%112 : memref<128xf32, #tpu.memory_space<vmem>>) target_semaphore(%114 : memref<!tpu.dma_semaphore, #tpu.memory_space<semaphore_mem>>)
    }
    %c2_i32_12 = arith.constant 2 : i32
    %c0 = arith.constant 0 : index
    %c0_13 = arith.constant 0 : index
    %4 = vector.load %arg4[%c0, %c0_13] : memref<128x128xbf16, #tpu.memory_space<vmem>>, vector<128x128xbf16>
    %c0_14 = arith.constant 0 : index
    %c0_15 = arith.constant 0 : index
    %5 = vector.load %arg5[%c0_14, %c0_15] : memref<1x128xf32, #tpu.memory_space<vmem>>, vector<1x128xf32>
    %c0_i32_16 = arith.constant 0 : i32
    %c2_i32_17 = arith.constant 2 : i32
    %6 = arith.addi %c0_i32_16, %c2_i32_17 : i32
    %c1_i32_18 = arith.constant 1 : i32
    scf.for %arg9 = %c0_i32_16 to %6 step %c1_i32_18  : i32 {
      %c0_i32_51 = arith.constant 0 : i32
      %c0_i32_52 = arith.constant 0 : i32
      %c0_i32_53 = arith.constant 0 : i32
      %c0_i32_54 = arith.constant 0 : i32
      %c0_i32_55 = arith.constant 0 : i32
      %101 = tpu.memref_slice %arg1[%c0_i32_51, %c0_i32_52, %c0_i32_55] : memref<2x8x128xf32, #tpu.memory_space<any>> -> memref<1x1x128xf32, #tpu.memory_space<any>>
      %102 = tpu.memref_squeeze %101 : memref<1x1x128xf32, #tpu.memory_space<any>> -> memref<128xf32, #tpu.memory_space<any>>
      %c0_i32_56 = arith.constant 0 : i32
      %103 = tpu.memref_slice %arg7[%c0_i32_53, %c0_i32_56] : memref<32x128xf32, #tpu.memory_space<vmem>> -> memref<1x128xf32, #tpu.memory_space<vmem>>
      %104 = tpu.memref_squeeze %103 : memref<1x128xf32, #tpu.memory_space<vmem>> -> memref<128xf32, #tpu.memory_space<vmem>>
      %105 = tpu.memref_slice %arg8[%c0_i32_54] : memref<3x!tpu.dma_semaphore, #tpu.memory_space<semaphore_mem>> -> memref<1x!tpu.dma_semaphore, #tpu.memory_space<semaphore_mem>>
      %106 = tpu.memref_squeeze %105 : memref<1x!tpu.dma_semaphore, #tpu.memory_space<semaphore_mem>> -> memref<!tpu.dma_semaphore, #tpu.memory_space<semaphore_mem>>
      tpu.wait_dma2 semaphore(%106 : memref<!tpu.dma_semaphore, #tpu.memory_space<semaphore_mem>>) src(%102 : memref<128xf32, #tpu.memory_space<any>>) dst(%104 : memref<128xf32, #tpu.memory_space<vmem>>)
    }
    %c0_19 = arith.constant 0 : index
    %c0_20 = arith.constant 0 : index
    %7 = vector.load %arg7[%c0_19, %c0_20] : memref<32x128xf32, #tpu.memory_space<vmem>>, vector<8x128xf32>
    %8 = arith.truncf %7 : vector<8x128xf32> to vector<8x128xbf16>
    %cst = arith.constant dense<0.000000e+00> : vector<8x128xf32>
    %9 = tpu.matmul %8, %4, %cst {dimension_numbers = #tpu.dot_dimension_numbers<[1], [0], [0], [1], [0, 0, 1, 1], [], []>} : vector<8x128xbf16>, vector<128x128xbf16>, vector<8x128xf32> -> vector<8x128xf32>
    %10 = vector.broadcast %5 : vector<1x128xf32> to vector<8x128xf32>
    %11 = arith.addf %9, %10 : vector<8x128xf32>
    %12 = math.tanh %11 : vector<8x128xf32>
    %13 = arith.mulf %12, %12 : vector<8x128xf32>
    %cst_21 = arith.constant dense<0.000000e+00> : vector<8xf32>
    %14 = vector.multi_reduction <add>, %13, %cst_21 [1] : vector<8x128xf32> to vector<8xf32>
    %15 = vector.shape_cast %14 : vector<8xf32> to vector<8x1xf32>
    %cst_22 = arith.constant 1.000000e-24 : f32
    %16 = vector.broadcast %cst_22 : f32 to vector<8x1xf32>
    %17 = arith.maximumf %15, %16 : vector<8x1xf32>
    %18 = math.rsqrt %17 : vector<8x1xf32>
    %19 = vector.broadcast %18 : vector<8x1xf32> to vector<8x128xf32>
    %20 = arith.mulf %12, %19 : vector<8x128xf32>
    %c0_i32_23 = arith.constant 0 : i32
    %c2_i32_24 = arith.constant 2 : i32
    %21 = arith.addi %c0_i32_23, %c2_i32_24 : i32
    %c1_i32_25 = arith.constant 1 : i32
    scf.for %arg9 = %c0_i32_23 to %21 step %c1_i32_25  : i32 {
      %c0_i32_51 = arith.constant 0 : i32
      %c0_i32_52 = arith.constant 0 : i32
      %c8_i32 = arith.constant 8 : i32
      %c1_i32_53 = arith.constant 1 : i32
      %c0_i32_54 = arith.constant 0 : i32
      %101 = tpu.memref_slice %arg2[%c0_i32_51, %c0_i32_52, %c0_i32_54] : memref<2x8x128xf32, #tpu.memory_space<any>> -> memref<1x1x128xf32, #tpu.memory_space<any>>
      %102 = tpu.memref_squeeze %101 : memref<1x1x128xf32, #tpu.memory_space<any>> -> memref<128xf32, #tpu.memory_space<any>>
      %c0_i32_55 = arith.constant 0 : i32
      %103 = tpu.memref_slice %arg7[%c8_i32, %c0_i32_55] : memref<32x128xf32, #tpu.memory_space<vmem>> -> memref<1x128xf32, #tpu.memory_space<vmem>>
      %104 = tpu.memref_squeeze %103 : memref<1x128xf32, #tpu.memory_space<vmem>> -> memref<128xf32, #tpu.memory_space<vmem>>
      %105 = tpu.memref_slice %arg8[%c1_i32_53] : memref<3x!tpu.dma_semaphore, #tpu.memory_space<semaphore_mem>> -> memref<1x!tpu.dma_semaphore, #tpu.memory_space<semaphore_mem>>
      %106 = tpu.memref_squeeze %105 : memref<1x!tpu.dma_semaphore, #tpu.memory_space<semaphore_mem>> -> memref<!tpu.dma_semaphore, #tpu.memory_space<semaphore_mem>>
      tpu.wait_dma2 semaphore(%106 : memref<!tpu.dma_semaphore, #tpu.memory_space<semaphore_mem>>) src(%102 : memref<128xf32, #tpu.memory_space<any>>) dst(%104 : memref<128xf32, #tpu.memory_space<vmem>>)
    }
    %c8 = arith.constant 8 : index
    %c0_26 = arith.constant 0 : index
    %22 = vector.load %arg7[%c8, %c0_26] : memref<32x128xf32, #tpu.memory_space<vmem>>, vector<8x128xf32>
    %23 = arith.truncf %22 : vector<8x128xf32> to vector<8x128xbf16>
    %cst_27 = arith.constant dense<0.000000e+00> : vector<8x128xf32>
    %24 = tpu.matmul %23, %4, %cst_27 {dimension_numbers = #tpu.dot_dimension_numbers<[1], [0], [0], [1], [0, 0, 1, 1], [], []>} : vector<8x128xbf16>, vector<128x128xbf16>, vector<8x128xf32> -> vector<8x128xf32>
    %25 = vector.broadcast %5 : vector<1x128xf32> to vector<8x128xf32>
    %26 = arith.addf %24, %25 : vector<8x128xf32>
    %27 = math.tanh %26 : vector<8x128xf32>
    %28 = arith.mulf %27, %27 : vector<8x128xf32>
    %cst_28 = arith.constant dense<0.000000e+00> : vector<8xf32>
    %29 = vector.multi_reduction <add>, %28, %cst_28 [1] : vector<8x128xf32> to vector<8xf32>
    %30 = vector.shape_cast %29 : vector<8xf32> to vector<8x1xf32>
    %cst_29 = arith.constant 1.000000e-24 : f32
    %31 = vector.broadcast %cst_29 : f32 to vector<8x1xf32>
    %32 = arith.maximumf %30, %31 : vector<8x1xf32>
    %33 = math.rsqrt %32 : vector<8x1xf32>
    %34 = vector.broadcast %33 : vector<8x1xf32> to vector<8x128xf32>
    %35 = arith.mulf %27, %34 : vector<8x128xf32>
    %c0_i32_30 = arith.constant 0 : i32
    %c4_i32 = arith.constant 4 : i32
    %36 = arith.addi %c0_i32_30, %c4_i32 : i32
    %c1_i32_31 = arith.constant 1 : i32
    scf.for %arg9 = %c0_i32_30 to %36 step %c1_i32_31  : i32 {
      %c0_i32_51 = arith.constant 0 : i32
      %c0_i32_52 = arith.constant 0 : i32
      %c16_i32 = arith.constant 16 : i32
      %c2_i32_53 = arith.constant 2 : i32
      %c0_i32_54 = arith.constant 0 : i32
      %101 = tpu.memref_slice %arg3[%c0_i32_51, %c0_i32_52, %c0_i32_54] : memref<4x8x128xf32, #tpu.memory_space<any>> -> memref<1x1x128xf32, #tpu.memory_space<any>>
      %102 = tpu.memref_squeeze %101 : memref<1x1x128xf32, #tpu.memory_space<any>> -> memref<128xf32, #tpu.memory_space<any>>
      %c0_i32_55 = arith.constant 0 : i32
      %103 = tpu.memref_slice %arg7[%c16_i32, %c0_i32_55] : memref<32x128xf32, #tpu.memory_space<vmem>> -> memref<1x128xf32, #tpu.memory_space<vmem>>
      %104 = tpu.memref_squeeze %103 : memref<1x128xf32, #tpu.memory_space<vmem>> -> memref<128xf32, #tpu.memory_space<vmem>>
      %105 = tpu.memref_slice %arg8[%c2_i32_53] : memref<3x!tpu.dma_semaphore, #tpu.memory_space<semaphore_mem>> -> memref<1x!tpu.dma_semaphore, #tpu.memory_space<semaphore_mem>>
      %106 = tpu.memref_squeeze %105 : memref<1x!tpu.dma_semaphore, #tpu.memory_space<semaphore_mem>> -> memref<!tpu.dma_semaphore, #tpu.memory_space<semaphore_mem>>
      tpu.wait_dma2 semaphore(%106 : memref<!tpu.dma_semaphore, #tpu.memory_space<semaphore_mem>>) src(%102 : memref<128xf32, #tpu.memory_space<any>>) dst(%104 : memref<128xf32, #tpu.memory_space<vmem>>)
    }
    %c16 = arith.constant 16 : index
    %c0_32 = arith.constant 0 : index
    %37 = vector.load %arg7[%c16, %c0_32] : memref<32x128xf32, #tpu.memory_space<vmem>>, vector<16x128xf32>
    %38 = arith.truncf %37 : vector<16x128xf32> to vector<16x128xbf16>
    %cst_33 = arith.constant dense<0.000000e+00> : vector<16x128xf32>
    %39 = tpu.matmul %38, %4, %cst_33 {dimension_numbers = #tpu.dot_dimension_numbers<[1], [0], [0], [1], [0, 0, 1, 1], [], []>} : vector<16x128xbf16>, vector<128x128xbf16>, vector<16x128xf32> -> vector<16x128xf32>
    %40 = vector.broadcast %5 : vector<1x128xf32> to vector<16x128xf32>
    %41 = arith.addf %39, %40 : vector<16x128xf32>
    %42 = math.tanh %41 : vector<16x128xf32>
    %43 = arith.mulf %42, %42 : vector<16x128xf32>
    %cst_34 = arith.constant dense<0.000000e+00> : vector<16xf32>
    %44 = vector.multi_reduction <add>, %43, %cst_34 [1] : vector<16x128xf32> to vector<16xf32>
    %45 = vector.shape_cast %44 : vector<16xf32> to vector<16x1xf32>
    %cst_35 = arith.constant 1.000000e-24 : f32
    %46 = vector.broadcast %cst_35 : f32 to vector<16x1xf32>
    %47 = arith.maximumf %45, %46 : vector<16x1xf32>
    %48 = math.rsqrt %47 : vector<16x1xf32>
    %49 = vector.broadcast %48 : vector<16x1xf32> to vector<16x128xf32>
    %50 = arith.mulf %42, %49 : vector<16x128xf32>
    %51 = vector.extract_strided_slice %20 {offsets = [0, 0], sizes = [2, 128], strides = [1, 1]} : vector<8x128xf32> to vector<2x128xf32>
    %52 = vector.extract_strided_slice %35 {offsets = [0, 0], sizes = [2, 128], strides = [1, 1]} : vector<8x128xf32> to vector<2x128xf32>
    %cst_36 = arith.constant dense<0.000000e+00> : vector<2x2xf32>
    %53 = tpu.matmul %51, %52, %cst_36 {dimension_numbers = #tpu.dot_dimension_numbers<[1], [1], [0], [0], [0, 0, 1, 0], [], []>} : vector<2x128xf32>, vector<2x128xf32>, vector<2x2xf32> -> vector<2x2xf32>
    %cst_37 = arith.constant 2.000000e+01 : f32
    %54 = vector.broadcast %cst_37 : f32 to vector<2x2xf32>
    %55 = arith.mulf %53, %54 : vector<2x2xf32>
    %56 = vector.extract_strided_slice %50 {offsets = [0, 0], sizes = [2, 128], strides = [1, 1]} : vector<16x128xf32> to vector<2x128xf32>
    %57 = arith.mulf %51, %56 : vector<2x128xf32>
    %cst_38 = arith.constant dense<0.000000e+00> : vector<2xf32>
    %58 = vector.multi_reduction <add>, %57, %cst_38 [1] : vector<2x128xf32> to vector<2xf32>
    %59 = vector.shape_cast %58 : vector<2xf32> to vector<2x1xf32>
    %cst_39 = arith.constant 2.000000e+01 : f32
    %60 = vector.broadcast %cst_39 : f32 to vector<2x1xf32>
    %61 = arith.mulf %59, %60 : vector<2x1xf32>
    %62 = vector.extract_strided_slice %50 {offsets = [8, 0], sizes = [2, 128], strides = [1, 1]} : vector<16x128xf32> to vector<2x128xf32>
    %63 = arith.mulf %51, %62 : vector<2x128xf32>
    %cst_40 = arith.constant dense<0.000000e+00> : vector<2xf32>
    %64 = vector.multi_reduction <add>, %63, %cst_40 [1] : vector<2x128xf32> to vector<2xf32>
    %65 = vector.shape_cast %64 : vector<2xf32> to vector<2x1xf32>
    %cst_41 = arith.constant 2.000000e+01 : f32
    %66 = vector.broadcast %cst_41 : f32 to vector<2x1xf32>
    %67 = arith.mulf %65, %66 : vector<2x1xf32>
    %68 = tpu.iota {dimensions = array<i32: 0>} : vector<2x2xi32>
    %69 = tpu.iota {dimensions = array<i32: 1>} : vector<2x2xi32>
    %c1_i32_42 = arith.constant 1 : i32
    %70 = vector.broadcast %c1_i32_42 : i32 to vector<2x2xi32>
    %71 = arith.muli %68, %70 : vector<2x2xi32>
    %72 = arith.cmpi eq, %69, %71 : vector<2x2xi32>
    %cst_43 = arith.constant 0.000000e+00 : f32
    %73 = vector.broadcast %cst_43 : f32 to vector<2x2xf32>
    %74 = arith.select %72, %55, %73 : vector<2x2xi1>, vector<2x2xf32>
    %cst_44 = arith.constant dense<0.000000e+00> : vector<2xf32>
    %75 = vector.multi_reduction <add>, %74, %cst_44 [1] : vector<2x2xf32> to vector<2xf32>
    %76 = vector.shape_cast %75 : vector<2xf32> to vector<2x1xf32>
    %cst_45 = arith.constant dense<0xFF800000> : vector<2xf32>
    %77 = vector.multi_reduction <maximumf>, %55, %cst_45 [1] : vector<2x2xf32> to vector<2xf32>
    %78 = vector.shape_cast %77 : vector<2xf32> to vector<2x1xf32>
    %79 = arith.maximumf %78, %61 : vector<2x1xf32>
    %80 = arith.maximumf %79, %67 : vector<2x1xf32>
    %81 = vector.broadcast %80 : vector<2x1xf32> to vector<2x2xf32>
    %82 = arith.subf %55, %81 : vector<2x2xf32>
    %83 = math.exp %82 : vector<2x2xf32>
    %cst_46 = arith.constant dense<0.000000e+00> : vector<2xf32>
    %84 = vector.multi_reduction <add>, %83, %cst_46 [1] : vector<2x2xf32> to vector<2xf32>
    %85 = vector.shape_cast %84 : vector<2xf32> to vector<2x1xf32>
    %86 = arith.subf %61, %80 : vector<2x1xf32>
    %87 = math.exp %86 : vector<2x1xf32>
    %88 = arith.addf %85, %87 : vector<2x1xf32>
    %89 = arith.subf %67, %80 : vector<2x1xf32>
    %90 = math.exp %89 : vector<2x1xf32>
    %91 = arith.addf %88, %90 : vector<2x1xf32>
    %92 = math.log %91 : vector<2x1xf32>
    %93 = arith.addf %80, %92 : vector<2x1xf32>
    %94 = arith.subf %93, %76 : vector<2x1xf32>
    %95 = vector.shape_cast %94 : vector<2x1xf32> to vector<1x2x1xf32>
    %cst_47 = arith.constant dense<0.000000e+00> : vector<1xf32>
    %96 = vector.multi_reduction <add>, %95, %cst_47 [1, 2] : vector<1x2x1xf32> to vector<1xf32>
    %97 = vector.shape_cast %96 : vector<1xf32> to vector<1x1x1xf32>
    %98 = vector.extract %97[0, 0, 0] : f32 from vector<1x1x1xf32>
    %cst_48 = arith.constant 2.000000e+00 : f32
    %99 = arith.divf %98, %cst_48 : f32
    %c0_49 = arith.constant 0 : index
    %c0_50 = arith.constant 0 : index
    %100 = memref.load %arg6[%c0_49, %c0_50] : memref<1x1xf32, #tpu.memory_space<smem>>
    memref.store %99, %arg6[%c0_49, %c0_50] : memref<1x1xf32, #tpu.memory_space<smem>>
    return
  }
}

</mosaic_0001>

<llo_original>
// kernel: tpu_custom_call.1
$region0: #{tpu_custom_call.1}
  #allocation0 [shape = 'u32[]', space=smem, size = 0x4, offset = 0x4, fixed_abs, tag = 'smem constant byte address 0x4 - core index']
  #allocation1 [shape = 'u32[144,128]{1,0:T(1,128)}', space=vmem, size = 0x12000, scoped, tag = 'internal scratch']
  #allocation2 [shape = 'f32[32,128]{1,0:T(8,128)}', space=vmem, size = 0x4000, scoped, tag = 'scratch operand']
  #allocation3 [shape = 's32[3]{0}', space=sflag, size = 0xc, scoped, tag = 'scratch operand']
  #allocation10 [shape = 's32[]', space=sflag, size = 0x4, offset = 0, fixed_abs, tag = 'sflag constant byte address 0x0 - dummy sync flag']
  #allocation11 [shape = 's32[]', space=sflag, size = 0x4, offset = 0, fixed_abs, tag = 'sflag constant byte address 0x0 - dummy sync flag']
  #allocation12 [shape = 'u32[]', space=smem, size = 0x4, offset = 0x44, fixed_abs, tag = 'smem constant byte address 0x44 - assertion arg 0']
  #allocation13 [shape = 'u32[]', space=smem, size = 0x4, offset = 0x48, fixed_abs, tag = 'smem constant byte address 0x48 - assertion arg 1']
  #allocation14 [shape = 's32[]', space=sflag, size = 0x4, offset = 0, fixed_abs, tag = 'sflag constant byte address 0x0 - dummy sync flag']
  #allocation15 [shape = 's32[]', space=sflag, size = 0x4, offset = 0, fixed_abs, tag = 'sflag constant byte address 0x0 - dummy sync flag']
  #allocation16 [shape = 's32[]', space=sflag, size = 0x4, offset = 0, fixed_abs, tag = 'sflag constant byte address 0x0 - dummy sync flag']
  #allocation17 [shape = 's32[]', space=sflag, size = 0x4, offset = 0, fixed_abs, tag = 'sflag constant byte address 0x0 - dummy sync flag']
  #allocation18 [shape = 's32[]', space=sflag, size = 0x4, offset = 0, fixed_abs, tag = 'sflag constant byte address 0x0 - dummy sync flag']
  #allocation19 [shape = 's32[]', space=sflag, size = 0x4, offset = 0, fixed_abs, tag = 'sflag constant byte address 0x0 - dummy sync flag']
  %s0 = inlined_call_operand.hbm [shape: s32[8], index: 0, kind: input, shape index: {}]
  %s1 = inlined_call_operand.hbm [shape: f32[2,8,128], index: 1, kind: input, shape index: {}]
  %s2 = inlined_call_operand.hbm [shape: f32[2,8,128], index: 2, kind: input, shape index: {}]
  %s3 = inlined_call_operand.hbm [shape: f32[4,8,128], index: 3, kind: input, shape index: {}]
  %s4 = inlined_call_operand.hbm [shape: bf16[128,128], index: 4, kind: input, shape index: {}]
  %s5 = inlined_call_operand.vmem [shape: f32[1,128], index: 5, kind: input, shape index: {}]
  %s6 = inlined_call_operand.hbm [shape: f32[1,1], index: 6, kind: output, shape index: {}]
  %s7 = sld [smem:[#allocation0]]
  $region95: #{tpu_custom_call.1} parent=0
    _
  %s9 = ssub.s32 1, %s7
  %s10 = scalar_select 0, %s9, %s7
  $region1: #{tpu_custom_call.1} parent=0
    #allocation4 [shape = 'u8[512]{0}', space=smem, size = 0x200, scoped, tag = 'input window, operand 0, single buffered']
    #allocation5 [shape = 's32[1]{0}', space=sflag, size = 0x4, scoped, tag = 'scoped memory for tpu_custom_call.1']
    #allocation6 [shape = 's32[1]{0}', space=sflag, size = 0x4, scoped, tag = 'scoped memory for tpu_custom_call.1']
    #allocation7 [shape = 's32[1]{0}', space=sflag, size = 0x4, scoped, tag = 'scoped memory for tpu_custom_call.1']
    #allocation8 [shape = 'u8[32768]{0}', space=vmem, size = 0x8000, scoped, tag = 'input window, operand 4, single buffered']
    #allocation9 [shape = 'u8[512]{0}', space=smem, size = 0x200, scoped, tag = 'output window, operand 0, single buffered']
    %11 = vsyncpa [#allocation6], 0
    %12 = vsyncpa [#allocation5], 0
    %13 = vsyncpa [#allocation7], 0
    // Predicated region
    $region2: #{tpu_custom_call.1} parent=1 // pred_check
      _
    $region3: #{tpu_custom_call.1} parent=1 // pred_check_branch
      %15 = sbr.rel (0) target = $region5
    $region4: #{tpu_custom_call.1} parent=1 // pred_region
      %s17 = ssub.s32 16, 16
      %18 = vsyncadd [#allocation6], %s17
      %21 = dma.hbm_to_smem %s0, 16, [#allocation4], [#allocation6]
    $region5: #{tpu_custom_call.1} parent=1 // pred_fallthru
      _
    // Predicated region
    $region6: #{tpu_custom_call.1} parent=1 // pred_check
      _
    $region7: #{tpu_custom_call.1} parent=1 // pred_check_branch
      %23 = sbr.rel (0) target = $region9
    $region8: #{tpu_custom_call.1} parent=1 // pred_region
      %s25 = ssub.s32 1024, 1024
      %26 = vsyncadd [#allocation5], %s25
      %s27 = sshll.u32 [#allocation8], 4
      %s28 = int_to_ptr.vmem [resolvable:$true] %s27
      %33 = dma.hbm_to_vmem [thread:$0]  %s4, 1024, %s28, [#allocation5], 64, 64, 4
    $region9: #{tpu_custom_call.1} parent=1 // pred_fallthru
      _
    // Predicated region
    $region10: #{tpu_custom_call.1} parent=1 // pred_check
      _
    $region11: #{tpu_custom_call.1} parent=1 // pred_check_branch
      %35 = sbr.rel (0) target = $region13
    $region12: #{tpu_custom_call.1} parent=1 // pred_region
      _
    $region13: #{tpu_custom_call.1} parent=1 // pred_fallthru
      _
    // Predicated region
    $region14: #{tpu_custom_call.1} parent=1 // pred_check
      _
    $region15: #{tpu_custom_call.1} parent=1 // pred_check_branch
      %37 = sbr.rel (0) target = $region17
    $region16: #{tpu_custom_call.1} parent=1 // pred_region
      %38 = dma.done [#allocation6], 16
    $region17: #{tpu_custom_call.1} parent=1 // pred_fallthru
      _
    // Predicated region
    $region18: #{tpu_custom_call.1} parent=1 // pred_check
      _
    $region19: #{tpu_custom_call.1} parent=1 // pred_check_branch
      %40 = sbr.rel (0) target = $region21
    $region20: #{tpu_custom_call.1} parent=1 // pred_region
      %41 = dma.done [#allocation5], 1024
    $region21: #{tpu_custom_call.1} parent=1 // pred_fallthru
      _
    %42 = sfence
    loop: start=0, step=1, limit=2
    $region22: #{tpu_custom_call.1} parent=1 // loop_pre_header
      _
    $region23: #{tpu_custom_call.1} parent=1 // loop_header
      %s45 = sphi 0, %s49
      %p46 = scmp.ge.s32.totalorder %s45, 2
    $region24: #{tpu_custom_call.1} parent=1 // loop_header_branch
      %48 = sbr.rel (%p46) target = $region28
    $region25: #{tpu_custom_call.1} parent=1 // loop_body
      %s50 = sld [smem:[#allocation4 + %s45]]
      %s51 = smul.u32 %s45, 8
      %s52 = sadd.s32 %s50, %s51
      %s53 = smul.addr %s52, 16
      %s54 = scalar_lea.hbm %s1, %s53
      %s55 = scalar_lea.vmem [#allocation2], %s45
      // Predicated region
      $region29: #{tpu_custom_call.1} parent=25 // pred_check
        _
      $region30: #{tpu_custom_call.1} parent=25 // pred_check_branch
        %57 = sbr.rel target = $region32
      $region31: #{tpu_custom_call.1} parent=25 // pred_region
        %58 = sst [smem:[#allocation12]] [#allocation11]
        %59 = sst [smem:[#allocation13]] [#allocation10]
      $region32: #{tpu_custom_call.1} parent=25 // pred_fallthru
        _
      %61 = shalt.err (0)
      %s63 = sshll.u32 %s55, 4
      %s64 = int_to_ptr.vmem [resolvable:$true] %s63
      %66 = dma.hbm_to_vmem [thread:$0]  %s54, 16, %s64, [#allocation3]
    $region26: #{tpu_custom_call.1} parent=1 // loop_footer
      %s49 = sadd.s32 1, %s45
    $region27: #{tpu_custom_call.1} parent=1 // loop_footer_branch
      %44 = sbr.rel target = $region23
    $region28: #{tpu_custom_call.1} parent=1 // loop_exit
      _
    loop: start=0, step=1, limit=2
    $region33: #{tpu_custom_call.1} parent=1 // loop_pre_header
      _
    $region34: #{tpu_custom_call.1} parent=1 // loop_header
      %s68 = sphi 0, %s72
      %p69 = scmp.ge.s32.totalorder %s68, 2
    $region35: #{tpu_custom_call.1} parent=1 // loop_header_branch
      %71 = sbr.rel (%p69) target = $region39
    $region36: #{tpu_custom_call.1} parent=1 // loop_body
      %s73 = sadd.s32 %s68, 2
      %s74 = sld [smem:[#allocation4 + %s73]]
      %s75 = sadd.s32 %s68, 8
      %s76 = smul.u32 %s68, 8
      %s77 = sadd.s32 %s74, %s76
      %s78 = smul.addr %s77, 16
      %s79 = scalar_lea.hbm %s2, %s78
      %s80 = scalar_lea.vmem [#allocation2], %s75
      %s81 = scalar_lea.sflag [#allocation3], 1
      // Predicated region
      $region40: #{tpu_custom_call.1} parent=36 // pred_check
        _
      $region41: #{tpu_custom_call.1} parent=36 // pred_check_branch
        %83 = sbr.rel target = $region43
      $region42: #{tpu_custom_call.1} parent=36 // pred_region
        %84 = sst [smem:[#allocation12]] [#allocation15]
        %85 = sst [smem:[#allocation13]] [#allocation14]
      $region43: #{tpu_custom_call.1} parent=36 // pred_fallthru
        _
      %87 = shalt.err (0)
      %s89 = sshll.u32 %s80, 4
      %s90 = int_to_ptr.vmem [resolvable:$true] %s89
      %92 = dma.hbm_to_vmem [thread:$0]  %s79, 16, %s90, %s81
    $region37: #{tpu_custom_call.1} parent=1 // loop_footer
      %s72 = sadd.s32 1, %s68
    $region38: #{tpu_custom_call.1} parent=1 // loop_footer_branch
      %67 = sbr.rel target = $region34
    $region39: #{tpu_custom_call.1} parent=1 // loop_exit
      _
    loop: start=0, step=1, limit=2
    $region44: #{tpu_custom_call.1} parent=1 // loop_pre_header
      _
    $region45: #{tpu_custom_call.1} parent=1 // loop_header
      %s94 = sphi 0, %s98
      %p95 = scmp.ge.s32.totalorder %s94, 2
    $region46: #{tpu_custom_call.1} parent=1 // loop_header_branch
      %97 = sbr.rel (%p95) target = $region50
    $region47: #{tpu_custom_call.1} parent=1 // loop_body
      %s99 = smul.u32 %s94, 2
      %s100 = sadd.s32 %s99, 4
      %s101 = sld [smem:[#allocation4 + %s100]]
      %s102 = sadd.s32 %s94, 16
      %s103 = smul.u32 %s99, 8
      %s104 = sadd.s32 %s101, %s103
      %s105 = smul.addr %s104, 16
      %s106 = scalar_lea.hbm %s3, %s105
      %s107 = scalar_lea.vmem [#allocation2], %s102
      %s108 = scalar_lea.sflag [#allocation3], 2
      // Predicated region
      $region51: #{tpu_custom_call.1} parent=47 // pred_check
        _
      $region52: #{tpu_custom_call.1} parent=47 // pred_check_branch
        %110 = sbr.rel target = $region54
      $region53: #{tpu_custom_call.1} parent=47 // pred_region
        %111 = sst [smem:[#allocation12]] [#allocation17]
        %112 = sst [smem:[#allocation13]] [#allocation16]
      $region54: #{tpu_custom_call.1} parent=47 // pred_fallthru
        _
      %114 = shalt.err (0)
      %s116 = sshll.u32 %s107, 4
      %s117 = int_to_ptr.vmem [resolvable:$true] %s116
      %119 = dma.hbm_to_vmem [thread:$0]  %s106, 16, %s117, %s108
    $region48: #{tpu_custom_call.1} parent=1 // loop_footer
      %s98 = sadd.s32 1, %s94
    $region49: #{tpu_custom_call.1} parent=1 // loop_footer_branch
      %93 = sbr.rel target = $region45
    $region50: #{tpu_custom_call.1} parent=1 // loop_exit
      _
    loop: start=0, step=1, limit=2
    $region55: #{tpu_custom_call.1} parent=1 // loop_pre_header
      _
    $region56: #{tpu_custom_call.1} parent=1 // loop_header
      %s121 = sphi 0, %s125
      %p122 = scmp.ge.s32.totalorder %s121, 2
    $region57: #{tpu_custom_call.1} parent=1 // loop_header_branch
      %124 = sbr.rel (%p122) target = $region61
    $region58: #{tpu_custom_call.1} parent=1 // loop_body
      %s126 = smul.u32 %s121, 2
      %s127 = sadd.s32 %s126, 1
      %s128 = sadd.s32 %s126, 5
      %s129 = sld [smem:[#allocation4 + %s128]]
      %s130 = sadd.s32 %s121, 24
      %s131 = smul.u32 %s127, 8
      %s132 = sadd.s32 %s129, %s131
      %s133 = smul.addr %s132, 16
      %s134 = scalar_lea.hbm %s3, %s133
      %s135 = scalar_lea.vmem [#allocation2], %s130
      %s136 = scalar_lea.sflag [#allocation3], 2
      // Predicated region
      $region62: #{tpu_custom_call.1} parent=58 // pred_check
        _
      $region63: #{tpu_custom_call.1} parent=58 // pred_check_branch
        %138 = sbr.rel target = $region65
      $region64: #{tpu_custom_call.1} parent=58 // pred_region
        %139 = sst [smem:[#allocation12]] [#allocation19]
        %140 = sst [smem:[#allocation13]] [#allocation18]
      $region65: #{tpu_custom_call.1} parent=58 // pred_fallthru
        _
      %142 = shalt.err (0)
      %s144 = sshll.u32 %s135, 4
      %s145 = int_to_ptr.vmem [resolvable:$true] %s144
      %147 = dma.hbm_to_vmem [thread:$0]  %s134, 16, %s145, %s136
    $region59: #{tpu_custom_call.1} parent=1 // loop_footer
      %s125 = sadd.s32 1, %s121
    $region60: #{tpu_custom_call.1} parent=1 // loop_footer_branch
      %120 = sbr.rel target = $region56
    $region61: #{tpu_custom_call.1} parent=1 // loop_exit
      _
    %v148 = vld [vmem:[#allocation8] sm:$0xf]
    %v149 = vld [vmem:[#allocation8 + $0x4] sm:$0xf]
    %v150 = vld [vmem:[#allocation8 + $0x8] sm:$0xf]
    %v151 = vld [vmem:[#allocation8 + $0xc] sm:$0xf]
    %v152 = vld [vmem:[#allocation8 + $0x10] sm:$0xf]
    %v153 = vld [vmem:[#allocation8 + $0x14] sm:$0xf]
    %v154 = vld [vmem:[#allocation8 + $0x18] sm:$0xf]
    %v155 = vld [vmem:[#allocation8 + $0x1c] sm:$0xf]
    %v156 = vld [vmem:[#allocation8 + $0x20] sm:$0xf]
    %v157 = vld [vmem:[#allocation8 + $0x24] sm:$0xf]
    %v158 = vld [vmem:[#allocation8 + $0x28] sm:$0xf]
    %v159 = vld [vmem:[#allocation8 + $0x2c] sm:$0xf]
    %v160 = vld [vmem:[#allocation8 + $0x30] sm:$0xf]
    %v161 = vld [vmem:[#allocation8 + $0x34] sm:$0xf]
    %v162 = vld [vmem:[#allocation8 + $0x38] sm:$0xf]
    %v163 = vld [vmem:[#allocation8 + $0x3c] sm:$0xf]
    %v164 = vld [vmem:[%s5] sm:$0x1]
    loop: start=0, step=1, limit=2
    $region66: #{tpu_custom_call.1} parent=1 // loop_pre_header
      _
    $region67: #{tpu_custom_call.1} parent=1 // loop_header
      %s166 = sphi 0, %s170
      %p167 = scmp.ge.s32.totalorder %s166, 2
    $region68: #{tpu_custom_call.1} parent=1 // loop_header_branch
      %169 = sbr.rel (%p167) target = $region72
    $region69: #{tpu_custom_call.1} parent=1 // loop_body
      %172 = dma.done [#allocation3], 16
    $region70: #{tpu_custom_call.1} parent=1 // loop_footer
      %s170 = sadd.s32 1, %s166
    $region71: #{tpu_custom_call.1} parent=1 // loop_footer_branch
      %165 = sbr.rel target = $region67
    $region72: #{tpu_custom_call.1} parent=1 // loop_exit
      _
    %v173 = vld [vmem:[#allocation2] sm:$0xff]
    %v174 = vpack.c.bf16 %v173, %v173
    %v176 = vlaneseq
    %v177 = vshrl.u32 %v176, 7
    %v178 = vsub.s32 0, %v177
    %v179 = vrot.slane %v164, %v178
    %v197 = vunpack.c.l.b16 %v148
    %v198 = vunpack.c.l.b16 %v149
    %v199 = vunpack.c.l.b16 %v150
    %v200 = vunpack.c.l.b16 %v151
    %v201 = vunpack.c.l.b16 %v152
    %v202 = vunpack.c.l.b16 %v153
    %v203 = vunpack.c.l.b16 %v154
    %v204 = vunpack.c.l.b16 %v155
    %v205 = vunpack.c.l.b16 %v156
    %v206 = vunpack.c.l.b16 %v157
    %v207 = vunpack.c.l.b16 %v158
    %v208 = vunpack.c.l.b16 %v159
    %v209 = vunpack.c.l.b16 %v160
    %v210 = vunpack.c.l.b16 %v161
    %v211 = vunpack.c.l.b16 %v162
    %v212 = vunpack.c.l.b16 %v163
    %v213 = vpack.c.b16 %v198, %v197
    %v214 = vpack.c.b16 %v200, %v199
    %v215 = vpack.c.b16 %v202, %v201
    %v216 = vpack.c.b16 %v204, %v203
    %v217 = vpack.c.b16 %v206, %v205
    %v218 = vpack.c.b16 %v208, %v207
    %v219 = vpack.c.b16 %v210, %v209
    %v220 = vpack.c.b16 %v212, %v211
    %229 = vmatprep.subr.bf16.mxu0 0
    %230 = vmatpush1.bf16.msra.mxu0 %v220
    %231 = vmatprep.subr.bf16.mxu0 0
    %232 = vmatpush1.bf16.msra.mxu0 %v219
    %233 = vmatprep.subr.bf16.mxu0 0
    %234 = vmatpush1.bf16.msra.mxu0 %v218
    %235 = vmatprep.subr.bf16.mxu0 0
    %236 = vmatpush1.bf16.msra.mxu0 %v217
    %237 = vmatprep.subr.bf16.mxu0 0
    %238 = vmatpush1.bf16.msra.mxu0 %v216
    %239 = vmatprep.subr.bf16.mxu0 0
    %240 = vmatpush1.bf16.msra.mxu0 %v215
    %241 = vmatprep.subr.bf16.mxu0 0
    %242 = vmatpush1.bf16.msra.mxu0 %v214
    %243 = vmatprep.subr.bf16.mxu0 0
    %244 = vmatpush1.bf16.msra.mxu0 %v213
    %245 = vmatprep.subr.bf16.mxu0 0
    %246 = vmatpush2.bf16.msra.mxu0 0
    %247 = vmatprep.subr.bf16.mxu0 0
    %248 = vmatpush2.bf16.msra.mxu0 0
    %249 = vmatprep.subr.bf16.mxu0 0
    %250 = vmatpush2.bf16.msra.mxu0 0
    %251 = vmatprep.subr.bf16.mxu0 0
    %252 = vmatpush2.bf16.msra.mxu0 0
    %253 = vmatprep.subr.bf16.mxu0 0
    %254 = vmatpush2.bf16.msra.mxu0 0
    %255 = vmatprep.subr.bf16.mxu0 0
    %256 = vmatpush2.bf16.msra.mxu0 0
    %257 = vmatprep.subr.bf16.mxu0 0
    %258 = vmatpush2.bf16.msra.mxu0 0
    %259 = vmatprep.subr.bf16.mxu0 0
    %260 = vmatpush2.bf16.msra.mxu0 0
    %261 = vmatprep.mubr.bf16.mxu0 0
    %262 = vmatmul.mubr.bf16.gmra.mxu0 %v174
    %v263 = vpop.f32.mrf.mxu0
    %v264 = vadd.f32 %v179, %v263
    %v265 = vpop.f32.mrf.mxu0
    %v266 = vpop.f32.mrf.mxu0
    %v267 = vpop.f32.mrf.mxu0
    %268 = vdwg.mxu0
    %v269 = vtanh.pop %v264
    %v270 = vmul.f32 %v269, %v269
    %271 = vadd.xlane.f32.xlu0 %v270
    %v272 = vpop.xlane.xlu0 %271
    %v273 = vmax.f32 %v272, 1e-24
    %v274 = vrsqrt.pop %v273
    %v275 = vmul.f32 %v269, %v274
    loop: start=0, step=1, limit=2
    $region73: #{tpu_custom_call.1} parent=1 // loop_pre_header
      _
    $region74: #{tpu_custom_call.1} parent=1 // loop_header
      %s277 = sphi 0, %s281
      %p278 = scmp.ge.s32.totalorder %s277, 2
    $region75: #{tpu_custom_call.1} parent=1 // loop_header_branch
      %280 = sbr.rel (%p278) target = $region79
    $region76: #{tpu_custom_call.1} parent=1 // loop_body
      %s282 = scalar_lea.sflag [#allocation3], 1
      %284 = dma.done %s282, 16
    $region77: #{tpu_custom_call.1} parent=1 // loop_footer
      %s281 = sadd.s32 1, %s277
    $region78: #{tpu_custom_call.1} parent=1 // loop_footer_branch
      %276 = sbr.rel target = $region74
    $region79: #{tpu_custom_call.1} parent=1 // loop_exit
      _
    %v285 = vld [vmem:[#allocation2 + $0x8] sm:$0xff]
    %v286 = vpack.c.bf16 %v285, %v285
    %287 = vmatprep.subr.bf16.mxu0 0
    %288 = vmatpush1.bf16.msra.mxu0 %v220
    %289 = vmatprep.subr.bf16.mxu0 0
    %290 = vmatpush1.bf16.msra.mxu0 %v219
    %291 = vmatprep.subr.bf16.mxu0 0
    %292 = vmatpush1.bf16.msra.mxu0 %v218
    %293 = vmatprep.subr.bf16.mxu0 0
    %294 = vmatpush1.bf16.msra.mxu0 %v217
    %295 = vmatprep.subr.bf16.mxu0 0
    %296 = vmatpush1.bf16.msra.mxu0 %v216
    %297 = vmatprep.subr.bf16.mxu0 0
    %298 = vmatpush1.bf16.msra.mxu0 %v215
    %299 = vmatprep.subr.bf16.mxu0 0
    %300 = vmatpush1.bf16.msra.mxu0 %v214
    %301 = vmatprep.subr.bf16.mxu0 0
    %302 = vmatpush1.bf16.msra.mxu0 %v213
    %303 = vmatprep.subr.bf16.mxu0 0
    %304 = vmatpush2.bf16.msra.mxu0 0
    %305 = vmatprep.subr.bf16.mxu0 0
    %306 = vmatpush2.bf16.msra.mxu0 0
    %307 = vmatprep.subr.bf16.mxu0 0
    %308 = vmatpush2.bf16.msra.mxu0 0
    %309 = vmatprep.subr.bf16.mxu0 0
    %310 = vmatpush2.bf16.msra.mxu0 0
    %311 = vmatprep.subr.bf16.mxu0 0
    %312 = vmatpush2.bf16.msra.mxu0 0
    %313 = vmatprep.subr.bf16.mxu0 0
    %314 = vmatpush2.bf16.msra.mxu0 0
    %315 = vmatprep.subr.bf16.mxu0 0
    %316 = vmatpush2.bf16.msra.mxu0 0
    %317 = vmatprep.subr.bf16.mxu0 0
    %318 = vmatpush2.bf16.msra.mxu0 0
    %319 = vmatprep.mubr.bf16.mxu0 0
    %320 = vmatmul.mubr.bf16.gmra.mxu0 %v286
    %v321 = vpop.f32.mrf.mxu0
    %v322 = vadd.f32 %v179, %v321
    %v323 = vpop.f32.mrf.mxu0
    %v324 = vpop.f32.mrf.mxu0
    %v325 = vpop.f32.mrf.mxu0
    %326 = vdwg.mxu0
    %v327 = vtanh.pop %v322
    %v328 = vmul.f32 %v327, %v327
    %329 = vadd.xlane.f32.xlu0 %v328
    %v330 = vpop.xlane.xlu0 %329
    %v331 = vmax.f32 %v330, 1e-24
    %v332 = vrsqrt.pop %v331
    %v333 = vmul.f32 %v327, %v332
    loop: start=0, step=1, limit=4
    $region80: #{tpu_custom_call.1} parent=1 // loop_pre_header
      _
    $region81: #{tpu_custom_call.1} parent=1 // loop_header
      %s335 = sphi 0, %s339
      %p336 = scmp.ge.s32.totalorder %s335, 4
    $region82: #{tpu_custom_call.1} parent=1 // loop_header_branch
      %338 = sbr.rel (%p336) target = $region86
    $region83: #{tpu_custom_call.1} parent=1 // loop_body
      %s340 = scalar_lea.sflag [#allocation3], 2
      %342 = dma.done %s340, 16
    $region84: #{tpu_custom_call.1} parent=1 // loop_footer
      %s339 = sadd.s32 1, %s335
    $region85: #{tpu_custom_call.1} parent=1 // loop_footer_branch
      %334 = sbr.rel target = $region81
    $region86: #{tpu_custom_call.1} parent=1 // loop_exit
      _
    %v343 = vld [vmem:[#allocation2 + $0x10] sm:$0xff]
    %v344 = vld [vmem:[#allocation2 + $0x18] sm:$0xff]
    %v345 = vpack.c.bf16 %v344, %v343
    %346 = vmatprep.subr.bf16.mxu0 0
    %347 = vmatpush1.bf16.msra.mxu0 %v220
    %348 = vmatprep.subr.bf16.mxu0 0
    %349 = vmatpush1.bf16.msra.mxu0 %v219
    %350 = vmatprep.subr.bf16.mxu0 0
    %351 = vmatpush1.bf16.msra.mxu0 %v218
    %352 = vmatprep.subr.bf16.mxu0 0
    %353 = vmatpush1.bf16.msra.mxu0 %v217
    %354 = vmatprep.subr.bf16.mxu0 0
    %355 = vmatpush1.bf16.msra.mxu0 %v216
    %356 = vmatprep.subr.bf16.mxu0 0
    %357 = vmatpush1.bf16.msra.mxu0 %v215
    %358 = vmatprep.subr.bf16.mxu0 0
    %359 = vmatpush1.bf16.msra.mxu0 %v214
    %360 = vmatprep.subr.bf16.mxu0 0
    %361 = vmatpush1.bf16.msra.mxu0 %v213
    %362 = vmatprep.subr.bf16.mxu0 0
    %363 = vmatpush2.bf16.msra.mxu0 0
    %364 = vmatprep.subr.bf16.mxu0 0
    %365 = vmatpush2.bf16.msra.mxu0 0
    %366 = vmatprep.subr.bf16.mxu0 0
    %367 = vmatpush2.bf16.msra.mxu0 0
    %368 = vmatprep.subr.bf16.mxu0 0
    %369 = vmatpush2.bf16.msra.mxu0 0
    %370 = vmatprep.subr.bf16.mxu0 0
    %371 = vmatpush2.bf16.msra.mxu0 0
    %372 = vmatprep.subr.bf16.mxu0 0
    %373 = vmatpush2.bf16.msra.mxu0 0
    %374 = vmatprep.subr.bf16.mxu0 0
    %375 = vmatpush2.bf16.msra.mxu0 0
    %376 = vmatprep.subr.bf16.mxu0 0
    %377 = vmatpush2.bf16.msra.mxu0 0
    %378 = vmatprep.mubr.bf16.mxu0 0
    %379 = vmatmul.mubr.bf16.gmra.mxu0 %v345
    %v380 = vpop.f32.mrf.mxu0
    %v381 = vadd.f32 %v179, %v380
    %v382 = vpop.f32.mrf.mxu0
    %v383 = vpop.f32.mrf.mxu0
    %v384 = vadd.f32 %v179, %v383
    %v385 = vpop.f32.mrf.mxu0
    %386 = vdwg.mxu0
    %v387 = vtanh.pop %v381
    %v388 = vtanh.pop %v384
    %v389 = vmul.f32 %v387, %v387
    %v390 = vmul.f32 %v388, %v388
    %391 = vadd.xlane.f32.xlu0 %v389
    %v392 = vpop.xlane.xlu0 %391
    %393 = vadd.xlane.f32.xlu0 %v390
    %v394 = vpop.xlane.xlu0 %393
    %v395 = vmax.f32 %v392, 1e-24
    %v396 = vmax.f32 %v394, 1e-24
    %v397 = vrsqrt.pop %v395
    %v398 = vrsqrt.pop %v396
    %v399 = vmul.f32 %v387, %v397
    %v400 = vmul.f32 %v388, %v398
    %401 = vmatprep.subr.mxu0 0.0
    %402 = vmatpush1.xpose.msra.mxu0 0.0
    %403 = vmatprep.subr.mxu0 0.0
    %404 = vmatpush1.xpose.msra.mxu0 0.0
    %405 = vmatprep.subr.mxu0 0.0
    %406 = vmatpush1.xpose.msra.mxu0 0.0
    %407 = vmatprep.subr.mxu0 0.0
    %408 = vmatpush1.xpose.msra.mxu0 0.0
    %409 = vmatprep.subr.mxu0 0.0
    %410 = vmatpush1.xpose.msra.mxu0 0.0
    %411 = vmatprep.subr.mxu0 0.0
    %412 = vmatpush1.xpose.msra.mxu0 0.0
    %413 = vmatprep.subr.mxu0 0.0
    %414 = vmatpush1.xpose.msra.mxu0 0.0
    %415 = vmatprep.subr.mxu0 0.0
    %416 = vmatpush1.xpose.msra.mxu0 0.0
    %417 = vmatprep.subr.mxu0 0.0
    %418 = vmatpush1.xpose.msra.mxu0 0.0
    %419 = vmatprep.subr.mxu0 0.0
    %420 = vmatpush1.xpose.msra.mxu0 0.0
    %421 = vmatprep.subr.mxu0 0.0
    %422 = vmatpush1.xpose.msra.mxu0 0.0
    %423 = vmatprep.subr.mxu0 0.0
    %424 = vmatpush1.xpose.msra.mxu0 0.0
    %425 = vmatprep.subr.mxu0 0.0
    %426 = vmatpush1.xpose.msra.mxu0 0.0
    %427 = vmatprep.subr.mxu0 0.0
    %428 = vmatpush1.xpose.msra.mxu0 0.0
    %429 = vmatprep.subr.mxu0 0.0
    %430 = vmatpush1.xpose.msra.mxu0 0.0
    %431 = vmatprep.subr.mxu0 0.0
    %432 = vmatpush1.xpose.msra.mxu0 %v333
    %433 = vmatprep.subr.mxu0 0.0
    %434 = vmatpush2.xpose.msra.mxu0 0.0
    %435 = vmatprep.subr.mxu0 0.0
    %436 = vmatpush2.xpose.msra.mxu0 0.0
    %437 = vmatprep.subr.mxu0 0.0
    %438 = vmatpush2.xpose.msra.mxu0 0.0
    %439 = vmatprep.subr.mxu0 0.0
    %440 = vmatpush2.xpose.msra.mxu0 0.0
    %441 = vmatprep.subr.mxu0 0.0
    %442 = vmatpush2.xpose.msra.mxu0 0.0
    %443 = vmatprep.subr.mxu0 0.0
    %444 = vmatpush2.xpose.msra.mxu0 0.0
    %445 = vmatprep.subr.mxu0 0.0
    %446 = vmatpush2.xpose.msra.mxu0 0.0
    %447 = vmatprep.subr.mxu0 0.0
    %448 = vmatpush2.xpose.msra.mxu0 0.0
    %449 = vmatprep.subr.mxu0 0.0
    %450 = vmatpush2.xpose.msra.mxu0 0.0
    %451 = vmatprep.subr.mxu0 0.0
    %452 = vmatpush2.xpose.msra.mxu0 0.0
    %453 = vmatprep.subr.mxu0 0.0
    %454 = vmatpush2.xpose.msra.mxu0 0.0
    %455 = vmatprep.subr.mxu0 0.0
    %456 = vmatpush2.xpose.msra.mxu0 0.0
    %457 = vmatprep.subr.mxu0 0.0
    %458 = vmatpush2.xpose.msra.mxu0 0.0
    %459 = vmatprep.subr.mxu0 0.0
    %460 = vmatpush2.xpose.msra.mxu0 0.0
    %461 = vmatprep.subr.mxu0 0.0
    %462 = vmatpush2.xpose.msra.mxu0 0.0
    %463 = vmatprep.subr.mxu0 0.0
    %464 = vmatpush2.xpose.msra.mxu0 0.0
    %465 = vmatprep.mubr.f32.mxu0 0.0
    %466 = vmatmul.mubr.f32.gmra.mxu0 %v275
    %v467 = vpop.f32.mrf.mxu0
    %v468 = vadd.f32 0.0, %v467
    %v469 = vpop.f32.mrf.mxu0
    %470 = vdwg.mxu0
    %v471 = vmul.f32 %v468, 20.0
    %v472 = vmul.f32 %v275, %v399
    %vm473 = vcmask 1041408
    %v474 = vsel %vm473, %v472, 0.0
    %475 = vadd.xlane.f32.xlu0 %v474
    %v476 = vpop.xlane.xlu0 %475
    %v477 = vmul.f32 %v476, 20.0
    %v478 = vmul.f32 %v275, %v400
    %v479 = vsel %vm473, %v478, 0.0
    %480 = vadd.xlane.f32.xlu0 %v479
    %v481 = vpop.xlane.xlu0 %480
    %v482 = vmul.f32 %v481, 20.0
    %v483 = vlaneseq
    %v484 = vshrl.u32 %v483, 7
    %v485 = vlaneseq
    %v486 = vand.u32 %v485, 127
    %vm487 = vcmp.eq.s32.totalorder %v486, %v484
    %v488 = vsel %vm487, %v471, 0.0
    %vm489 = vcmask 9216
    %v490 = vsel %vm489, %v488, 0.0
    %491 = vadd.xlane.f32.xlu0 %v490
    %v492 = vpop.xlane.xlu0 %491
    %v493 = vsel %vm489, %v471, -inf
    %494 = vmax.xlane.f32.xlu0 %v493
    %v495 = vpop.xlane.xlu0 %494
    %v496 = vmax.f32 %v495, %v477
    %v497 = vmax.f32 %v496, %v482
    %v498 = vsub.f32 %v471, %v497
    %v499 = vmul.f32 %v498, 1.442695
    %v500 = vpow.pop %v499
    %v501 = vsel %vm489, %v500, 0.0
    %502 = vadd.xlane.f32.xlu0 %v501
    %v503 = vpop.xlane.xlu0 %502
    %v504 = vsub.f32 %v477, %v497
    %v505 = vmul.f32 %v504, 1.442695
    %v506 = vpow.pop %v505
    %v507 = vadd.f32 %v503, %v506
    %v508 = vsub.f32 %v482, %v497
    %v509 = vmul.f32 %v508, 1.442695
    %v510 = vpow.pop %v509
    %v511 = vadd.f32 %v507, %v510
    %v512 = vlog2.pop %v511
    %v513 = vmul.f32 %v512, 0.6931472
    %v514 = vadd.f32 %v497, %v513
    %v515 = vsub.f32 %v514, %v492
    %vm516 = vcmask 1024
    %v517 = vsel %vm516, %v515, 0.0
    %518 = vadd.xlane.f32.xlu0 %v517
    %v519 = vpop.xlane.xlu0 %518
    %v520 = vrot.slane %v519, 4
    %v521 = vadd.f32 %v519, %v520
    %v522 = vrot.slane %v521, 2
    %v523 = vadd.f32 %v521, %v522
    %v524 = vrot.slane %v523, 1
    %v525 = vadd.f32 %v523, %v524
    %s526 = vtos %v525
    %v527 = vrcp.pop 2.0
    %s528 = vtos %v527
    %s529 = smul.f32 %s526, %s528
    %s530 = scalar_lea.smem [#allocation9], 0
    %531 = sst [smem:[%s530]] %s529
    // Predicated region
    $region87: #{tpu_custom_call.1} parent=1 // pred_check
      _
    $region88: #{tpu_custom_call.1} parent=1 // pred_check_branch
      %533 = sbr.rel (0) target = $region90
    $region89: #{tpu_custom_call.1} parent=1 // pred_region
      %s535 = ssub.s32 16, 16
      %536 = vsyncadd [#allocation7], %s535
      %539 = dma.smem_to_hbm [#allocation9], 16, %s6, [#allocation7]
    $region90: #{tpu_custom_call.1} parent=1 // pred_fallthru
      _
    // Predicated region
    $region91: #{tpu_custom_call.1} parent=1 // pred_check
      _
    $region92: #{tpu_custom_call.1} parent=1 // pred_check_branch
      %541 = sbr.rel (0) target = $region94
    $region93: #{tpu_custom_call.1} parent=1 // pred_region
      %542 = dma.done [#allocation7], 16
    $region94: #{tpu_custom_call.1} parent=1 // pred_fallthru
      _
    %543 = sfence
    %544 = vsyncpa [#allocation5], 1
    %545 = vsyncpa [#allocation6], 1
    %546 = vsyncpa [#allocation7], 1
  %547 = vsyncmov [#allocation3]
  %s548 = vpop.sfrf %547
  %p549 = scmp.eq.s32.totalorder %s548, 0
  %p550 = pneg %p549
  %552 = shalt.err (%p550)
  %s553 = scalar_lea.sflag [#allocation3], 1
  %554 = vsyncmov %s553
  %s555 = vpop.sfrf %554
  %p556 = scmp.eq.s32.totalorder %s555, 0
  %p557 = pneg %p556
  %559 = shalt.err (%p557)
  %s560 = scalar_lea.sflag [#allocation3], 2
  %561 = vsyncmov %s560
  %s562 = vpop.sfrf %561
  %p563 = scmp.eq.s32.totalorder %s562, 0
  %p564 = pneg %p563
  %566 = shalt.err (%p564)

</llo_original>
